<compile_context>
chip_gen: v7x
topology: tpu7x:2x2x1
jax: 0.10.0
libtpu: 0.0.40
codegen_flags: <defaults>
</compile_context>

<pallas_src>
import functools

import jax
import jax.numpy as jnp
from jax import lax
from jax.experimental import pallas as pl
from jax.experimental.pallas import tpu as pltpu

IGNORE_INDEX = 255
_LANE = 128
_MAX_TILE = 16384                     # max pixels (lanes) per grid step
_TILE_BUDGET_BYTES = 8 * 1024 * 1024  # budget for double-buffered input tiles


def _choose_tile_hw(hw, c, itemsize):
    """Pick the pixel-tile width: multiple of 128 (or the full dim), VMEM-budgeted."""
    if hw <= _LANE:
        return hw                                   # full-dim block is allowed
    c_pad = max(8, -(-c // 8) * 8)                  # class axis padded to 8 sublanes
    # bytes per lane column: double-buffered logits tile + double-buffered
    # int32 targets (padded to 8 sublanes).
    bytes_per_col = 2 * (c_pad * itemsize + 8 * 4)
    max_tile = max(_LANE, (_TILE_BUDGET_BYTES // bytes_per_col) // _LANE * _LANE)
    hw_rounded = -(-hw // _LANE) * _LANE
    return min(max_tile, _MAX_TILE, hw_rounded)


def _ce2d_kernel(logits_ref, tgt_ref, sum_ref, cnt_ref,
                 acc_loss, acc_cnt, *, ignore_index, hw, ragged):
    """One pixel tile of one image.

    logits_ref: (C, T) VMEM, classes on sublanes, pixels on lanes
    tgt_ref:    (1, T) int32 VMEM
    sum_ref:    (1,) f32 SMEM   -- final sum of -log p[target] over valid px
    cnt_ref:    (1,) f32 SMEM   -- final count of valid pixels
    acc_loss:   (1, T) f32 VMEM scratch (per-lane running partial sums)
    acc_cnt:    (1, T) f32 VMEM scratch
    """
    b = pl.program_id(0)
    j = pl.program_id(1)

    @pl.when((b == 0) & (j == 0))
    def _():
        acc_loss[...] = jnp.zeros_like(acc_loss)
        acc_cnt[...] = jnp.zeros_like(acc_cnt)

    x = logits_ref[...].astype(jnp.float32)                      # (C, T)
    tgt = tgt_ref[...]                                           # (1, T)
    t = x.shape[1]

    # numerically stable log-sum-exp over the class (sublane) axis
    m = jnp.max(x, axis=0, keepdims=True)                        # (1, T)
    lse = jnp.log(jnp.sum(jnp.exp(x - m), axis=0, keepdims=True)) + m

    # logits[target] via one-hot select + sublane reduce (no full logp slab)
    class_ids = lax.broadcasted_iota(jnp.int32, x.shape, 0)      # (C, T)
    picked = jnp.sum(jnp.where(class_ids == tgt, x, 0.0),
                     axis=0, keepdims=True)                      # (1, T)

    # mask ignore_index pixels; also mask out-of-range lanes of the ragged
    # tail tile (select-based, never multiplicative, so OOB NaN/Inf is safe).
    valid = tgt != ignore_index                                  # (1, T)
    if ragged:
        col = lax.broadcasted_iota(jnp.int32, tgt.shape, 1) + j * t
        valid = valid & (col < hw)

    acc_loss[...] += jnp.where(valid, lse - picked, 0.0)
    acc_cnt[...] += valid.astype(jnp.float32)

    @pl.when((b == pl.num_programs(0) - 1) & (j == pl.num_programs(1) - 1))
    def _():
        sum_ref[0] = jnp.sum(acc_loss[...])
        cnt_ref[0] = jnp.sum(acc_cnt[...])


def cross_entropy_loss_2d(outputs, targets, *, ignore_index=IGNORE_INDEX):
    """outputs: (N, C, H, W) float; targets: (N, H, W) int. Returns scalar mean."""
    n, c, h, w = outputs.shape
    hw = h * w

    logits = outputs.reshape(n, c, hw)                  # free: no data movement
    tgt = targets.reshape(n, 1, hw).astype(jnp.int32)   # tiny array

    tile = _choose_tile_hw(hw, c, jnp.dtype(outputs.dtype).itemsize)
    n_tiles = pl.cdiv(hw, tile)
    ragged = (hw % tile) != 0

    loss_sum, valid_cnt = pl.pallas_call(
        functools.partial(_ce2d_kernel, ignore_index=ignore_index,
                          hw=hw, ragged=ragged),
        out_shape=(
            jax.ShapeDtypeStruct((1,), jnp.float32),
            jax.ShapeDtypeStruct((1,), jnp.float32),
        ),
        grid_spec=pltpu.PrefetchScalarGridSpec(
            num_scalar_prefetch=0,
            grid=(n, n_tiles),
            in_specs=[
                # batch dim squeezed out of the kernel view (None)
                pl.BlockSpec((None, c, tile), lambda b, j: (b, 0, j)),
                pl.BlockSpec((None, 1, tile), lambda b, j: (b, 0, j)),
            ],
            out_specs=(
                pl.BlockSpec(memory_space=pltpu.SMEM),
                pl.BlockSpec(memory_space=pltpu.SMEM),
            ),
            scratch_shapes=[
                pltpu.VMEM((1, tile), jnp.float32),   # per-lane loss partials
                pltpu.VMEM((1, tile), jnp.float32),   # per-lane count partials
            ],
        ),
        compiler_params=pltpu.CompilerParams(
            dimension_semantics=("arbitrary", "arbitrary"),
            vmem_limit_bytes=32 * 1024 * 1024),
    )(logits, tgt)

    # size_average=True: mean over non-ignored pixels (weight=None)
    return loss_sum[0] / valid_cnt[0]


def _reference(outputs, targets, ignore_index=IGNORE_INDEX):
    """Pure-JAX reference for verification."""
    logp = jax.nn.log_softmax(outputs.astype(jnp.float32), axis=1)  # (N,C,H,W)
    valid = targets != ignore_index
    safe_t = jnp.where(valid, targets, 0).astype(jnp.int32)
    picked = jnp.take_along_axis(logp, safe_t[:, None, :, :], axis=1)[:, 0]
    losses = jnp.where(valid, -picked, 0.0)
    return losses.sum() / valid.sum().astype(jnp.float32)


if __name__ == "__main__":
    key = jax.random.PRNGKey(0)
    k1, k2, k3, k4, k5, k6 = jax.random.split(key, 6)

    # Case 1: aligned pixel dim (H*W = 256, exact multiple of 128)
    N, C, H, W = 2, 4, 16, 16
    outputs = jax.random.normal(k1, (N, C, H, W), dtype=jnp.float32)
    targets = jax.random.randint(k2, (N, H, W), 0, C, dtype=jnp.int32)
    ignore_mask = jax.random.bernoulli(k3, 0.1, (N, H, W))
    targets = jnp.where(ignore_mask, IGNORE_INDEX, targets)

    loss = jax.block_until_ready(cross_entropy_loss_2d(outputs, targets))
    ref = _reference(outputs, targets)
    assert jnp.allclose(loss, ref, rtol=1e-5, atol=1e-5), (loss, ref)

    # Case 2: ragged pixel dim (H*W = 143 -> padded 256-wide tail tile)
    N2, C2, H2, W2 = 1, 5, 13, 11
    outputs2 = jax.random.normal(k4, (N2, C2, H2, W2), dtype=jnp.float32)
    targets2 = jax.random.randint(k5, (N2, H2, W2), 0, C2, dtype=jnp.int32)
    ignore_mask2 = jax.random.bernoulli(k6, 0.1, (N2, H2, W2))
    targets2 = jnp.where(ignore_mask2, IGNORE_INDEX, targets2)

    loss2 = jax.block_until_ready(cross_entropy_loss_2d(outputs2, targets2))
    ref2 = _reference(outputs2, targets2)
    assert jnp.allclose(loss2, ref2, rtol=1e-5, atol=1e-5), (loss2, ref2)

    print("KERNEL_OK")
</pallas_src>

<mosaic_0001>
module attributes {stable_mosaic.version = 11 : i64} {
  func.func @_ce2d_kernel(%arg0: i32, %arg1: i32, %arg2: memref<1x4x256xf32, #tpu.memory_space<vmem>>, %arg3: memref<1x1x256xi32, #tpu.memory_space<vmem>>, %arg4: memref<1xf32, #tpu.memory_space<smem>>, %arg5: memref<1xf32, #tpu.memory_space<smem>>, %arg6: memref<1x256xf32, #tpu.memory_space<vmem>>, %arg7: memref<1x256xf32, #tpu.memory_space<vmem>>) attributes {dimension_semantics = [#tpu.dimension_semantics<arbitrary>, #tpu.dimension_semantics<arbitrary>], iteration_bounds = array<i64: 2, 1>, scalar_prefetch = 0 : i64, scratch_operands = 2 : i64, tpu.core_type = #tpu.core_type<tc>, window_params = [{transform_indices = @transform_0, window_bounds = array<i64: 1, 4, 256>}, {transform_indices = @transform_1, window_bounds = array<i64: 1, 1, 256>}, {transform_indices = @transform_2, window_bounds = array<i64: 1>}, {transform_indices = @transform_3, window_bounds = array<i64: 1>}]} {
    %c0_i32 = arith.constant 0 : i32
    %0 = arith.cmpi eq, %arg0, %c0_i32 : i32
    %c0_i32_0 = arith.constant 0 : i32
    %1 = arith.cmpi eq, %arg1, %c0_i32_0 : i32
    %2 = arith.andi %0, %1 : i1
    %3 = arith.extui %2 : i1 to i32
    %c0_i32_1 = arith.constant 0 : i32
    %4 = arith.cmpi ne, %3, %c0_i32_1 : i32
    scf.if %4 {
      %cst_21 = arith.constant 0.000000e+00 : f32
      %43 = vector.broadcast %cst_21 : f32 to vector<1x256xf32>
      %c0_22 = arith.constant 0 : index
      %c0_23 = arith.constant 0 : index
      %44 = vector.load %arg6[%c0_22, %c0_23] : memref<1x256xf32, #tpu.memory_space<vmem>>, vector<1x256xf32>
      tpu.vector_store %arg6[%c0_22, %c0_23], %43 {strides = array<i32>} : memref<1x256xf32, #tpu.memory_space<vmem>>, vector<1x256xf32>,
      %cst_24 = arith.constant 0.000000e+00 : f32
      %45 = vector.broadcast %cst_24 : f32 to vector<1x256xf32>
      %c0_25 = arith.constant 0 : index
      %c0_26 = arith.constant 0 : index
      %46 = vector.load %arg7[%c0_25, %c0_26] : memref<1x256xf32, #tpu.memory_space<vmem>>, vector<1x256xf32>
      tpu.vector_store %arg7[%c0_25, %c0_26], %45 {strides = array<i32>} : memref<1x256xf32, #tpu.memory_space<vmem>>, vector<1x256xf32>,
    } else {
    }
    %c0 = arith.constant 0 : index
    %c0_2 = arith.constant 0 : index
    %c0_3 = arith.constant 0 : index
    %5 = vector.load %arg2[%c0, %c0_2, %c0_3] : memref<1x4x256xf32, #tpu.memory_space<vmem>>, vector<1x4x256xf32>
    %6 = vector.shape_cast %5 : vector<1x4x256xf32> to vector<4x256xf32>
    %c0_4 = arith.constant 0 : index
    %c0_5 = arith.constant 0 : index
    %c0_6 = arith.constant 0 : index
    %7 = vector.load %arg3[%c0_4, %c0_5, %c0_6] : memref<1x1x256xi32, #tpu.memory_space<vmem>>, vector<1x1x256xi32>
    %8 = vector.shape_cast %7 : vector<1x1x256xi32> to vector<1x256xi32>
    %cst = arith.constant dense<0xFF800000> : vector<256xf32>
    %9 = vector.multi_reduction <maximumf>, %6, %cst [0] : vector<4x256xf32> to vector<256xf32>
    %10 = vector.shape_cast %9 : vector<256xf32> to vector<1x256xf32>
    %11 = vector.broadcast %10 : vector<1x256xf32> to vector<4x256xf32>
    %12 = arith.subf %6, %11 : vector<4x256xf32>
    %13 = math.exp %12 : vector<4x256xf32>
    %cst_7 = arith.constant dense<0.000000e+00> : vector<256xf32>
    %14 = vector.multi_reduction <add>, %13, %cst_7 [0] : vector<4x256xf32> to vector<256xf32>
    %15 = vector.shape_cast %14 : vector<256xf32> to vector<1x256xf32>
    %16 = math.log %15 : vector<1x256xf32>
    %17 = arith.addf %16, %10 : vector<1x256xf32>
    %18 = tpu.iota {dimensions = array<i32: 0>} : vector<4x256xi32>
    %19 = vector.broadcast %8 : vector<1x256xi32> to vector<4x256xi32>
    %20 = arith.cmpi eq, %18, %19 : vector<4x256xi32>
    %cst_8 = arith.constant 0.000000e+00 : f32
    %21 = vector.broadcast %cst_8 : f32 to vector<4x256xf32>
    %22 = arith.select %20, %6, %21 : vector<4x256xi1>, vector<4x256xf32>
    %cst_9 = arith.constant dense<0.000000e+00> : vector<256xf32>
    %23 = vector.multi_reduction <add>, %22, %cst_9 [0] : vector<4x256xf32> to vector<256xf32>
    %24 = vector.shape_cast %23 : vector<256xf32> to vector<1x256xf32>
    %c255_i32 = arith.constant 255 : i32
    %25 = vector.broadcast %c255_i32 : i32 to vector<1x256xi32>
    %26 = arith.cmpi ne, %8, %25 : vector<1x256xi32>
    %c0_10 = arith.constant 0 : index
    %c0_11 = arith.constant 0 : index
    %27 = vector.load %arg6[%c0_10, %c0_11] : memref<1x256xf32, #tpu.memory_space<vmem>>, vector<1x256xf32>
    %28 = arith.subf %17, %24 : vector<1x256xf32>
    %cst_12 = arith.constant 0.000000e+00 : f32
    %29 = vector.broadcast %cst_12 : f32 to vector<1x256xf32>
    %30 = arith.select %26, %28, %29 : vector<1x256xi1>, vector<1x256xf32>
    %31 = arith.addf %27, %30 : vector<1x256xf32>
    %c0_13 = arith.constant 0 : index
    %c0_14 = arith.constant 0 : index
    %32 = vector.load %arg6[%c0_13, %c0_14] : memref<1x256xf32, #tpu.memory_space<vmem>>, vector<1x256xf32>
    tpu.vector_store %arg6[%c0_13, %c0_14], %31 {strides = array<i32>} : memref<1x256xf32, #tpu.memory_space<vmem>>, vector<1x256xf32>,
    %c0_15 = arith.constant 0 : index
    %c0_16 = arith.constant 0 : index
    %33 = vector.load %arg7[%c0_15, %c0_16] : memref<1x256xf32, #tpu.memory_space<vmem>>, vector<1x256xf32>
    %34 = arith.extui %26 : vector<1x256xi1> to vector<1x256xi32>
    %35 = arith.sitofp %34 : vector<1x256xi32> to vector<1x256xf32>
    %36 = arith.addf %33, %35 : vector<1x256xf32>
    %c0_17 = arith.constant 0 : index
    %c0_18 = arith.constant 0 : index
    %37 = vector.load %arg7[%c0_17, %c0_18] : memref<1x256xf32, #tpu.memory_space<vmem>>, vector<1x256xf32>
    tpu.vector_store %arg7[%c0_17, %c0_18], %36 {strides = array<i32>} : memref<1x256xf32, #tpu.memory_space<vmem>>, vector<1x256xf32>,
    %c1_i32 = arith.constant 1 : i32
    %38 = arith.cmpi eq, %arg0, %c1_i32 : i32
    %c0_i32_19 = arith.constant 0 : i32
    %39 = arith.cmpi eq, %arg1, %c0_i32_19 : i32
    %40 = arith.andi %38, %39 : i1
    %41 = arith.extui %40 : i1 to i32
    %c0_i32_20 = arith.constant 0 : i32
    %42 = arith.cmpi ne, %41, %c0_i32_20 : i32
    scf.if %42 {
      %c0_21 = arith.constant 0 : index
      %c0_22 = arith.constant 0 : index
      %43 = vector.load %arg6[%c0_21, %c0_22] : memref<1x256xf32, #tpu.memory_space<vmem>>, vector<1x256xf32>
      %44 = vector.shape_cast %43 : vector<1x256xf32> to vector<1x1x256xf32>
      %cst_23 = arith.constant dense<0.000000e+00> : vector<1xf32>
      %45 = vector.multi_reduction <add>, %44, %cst_23 [1, 2] : vector<1x1x256xf32> to vector<1xf32>
      %46 = vector.shape_cast %45 : vector<1xf32> to vector<1x1x1xf32>
      %47 = vector.extract %46[0, 0, 0] : f32 from vector<1x1x1xf32>
      %c0_24 = arith.constant 0 : index
      %48 = memref.load %arg4[%c0_24] : memref<1xf32, #tpu.memory_space<smem>>
      memref.store %47, %arg4[%c0_24] : memref<1xf32, #tpu.memory_space<smem>>
      %c0_25 = arith.constant 0 : index
      %c0_26 = arith.constant 0 : index
      %49 = vector.load %arg7[%c0_25, %c0_26] : memref<1x256xf32, #tpu.memory_space<vmem>>, vector<1x256xf32>
      %50 = vector.shape_cast %49 : vector<1x256xf32> to vector<1x1x256xf32>
      %cst_27 = arith.constant dense<0.000000e+00> : vector<1xf32>
      %51 = vector.multi_reduction <add>, %50, %cst_27 [1, 2] : vector<1x1x256xf32> to vector<1xf32>
      %52 = vector.shape_cast %51 : vector<1xf32> to vector<1x1x1xf32>
      %53 = vector.extract %52[0, 0, 0] : f32 from vector<1x1x1xf32>
      %c0_28 = arith.constant 0 : index
      %54 = memref.load %arg5[%c0_28] : memref<1xf32, #tpu.memory_space<smem>>
      memref.store %53, %arg5[%c0_28] : memref<1xf32, #tpu.memory_space<smem>>
    } else {
    }
    return
  }
  func.func @transform_0(%arg0: i32, %arg1: i32) -> (i32, i32, i32) {
    %c0_i32 = arith.constant 0 : i32
    %c0_i32_0 = arith.constant 0 : i32
    return %arg0, %c0_i32, %arg1 : i32, i32, i32
  }
  func.func @transform_1(%arg0: i32, %arg1: i32) -> (i32, i32, i32) {
    %c0_i32 = arith.constant 0 : i32
    %c0_i32_0 = arith.constant 0 : i32
    return %arg0, %c0_i32, %arg1 : i32, i32, i32
  }
  func.func @transform_2(%arg0: i32, %arg1: i32) -> i32 {
    %c0_i32 = arith.constant 0 : i32
    %c0_i32_0 = arith.constant 0 : i32
    return %c0_i32 : i32
  }
  func.func @transform_3(%arg0: i32, %arg1: i32) -> i32 {
    %c0_i32 = arith.constant 0 : i32
    %c0_i32_0 = arith.constant 0 : i32
    return %c0_i32 : i32
  }
}

</mosaic_0001>

<llo_original>
// kernel: tpu_custom_call.1
$region0: #{tpu_custom_call.1}
  #allocation0 [shape = 'u32[]', space=smem, size = 0x4, offset = 0x4, fixed_abs, tag = 'smem constant byte address 0x4 - core index']
  #allocation1 [shape = 'u32[144,128]{1,0:T(1,128)}', space=vmem, size = 0x12000, scoped, tag = 'internal scratch']
  #allocation2 [shape = 'f32[1,256]{1,0:T(1,128)}', space=vmem, size = 0x400, scoped, tag = 'scratch operand']
  #allocation3 [shape = 'f32[1,256]{1,0:T(1,128)}', space=vmem, size = 0x400, scoped, tag = 'scratch operand']
  %s0 = inlined_call_operand.hbm [shape: f32[2,4,256], index: 0, kind: input, shape index: {}]
  %s1 = inlined_call_operand.hbm [shape: s32[2,1,256], index: 1, kind: input, shape index: {}]
  %s2 = inlined_call_operand.hbm [shape: f32[1], index: 2, kind: output, shape index: {0}]
  %s3 = inlined_call_operand.hbm [shape: f32[1], index: 3, kind: output, shape index: {1}]
  %4 = xla_tuple %s2, %s3
  %s5 = sld [smem:[#allocation0]]
  $region65: #{tpu_custom_call.1} parent=0
    _
  %s7 = ssub.s32 1, %s5
  %s8 = scalar_select 0, %s7, %s5
  $region1: #{tpu_custom_call.1} parent=0
    #allocation4 [shape = 'u8[8192]{0}', space=vmem, size = 0x2000, scoped, tag = 'input window, operand 0']
    #allocation5 [shape = 's32[2]{0}', space=sflag, size = 0x8, scoped, tag = 'scoped memory for tpu_custom_call.1']
    #allocation6 [shape = 's32[2]{0}', space=sflag, size = 0x8, scoped, tag = 'scoped memory for tpu_custom_call.1']
    #allocation7 [shape = 'u8[2048]{0}', space=vmem, size = 0x800, scoped, tag = 'input window, operand 1']
    #allocation8 [shape = 's32[2]{0}', space=sflag, size = 0x8, scoped, tag = 'scoped memory for tpu_custom_call.1']
    #allocation9 [shape = 'u8[512]{0}', space=smem, size = 0x200, scoped, tag = 'output window, operand 0, single buffered']
    #allocation10 [shape = 'u8[512]{0}', space=smem, size = 0x200, scoped, tag = 'output window, operand 1, single buffered']
    #allocation11 [shape = 's32[1]{0}', space=sflag, size = 0x4, scoped, tag = 'scoped memory for tpu_custom_call.1']
    %9 = vsyncpa [#allocation5], 0
    %s10 = scalar_lea.sflag [#allocation5], 1
    %11 = vsyncpa %s10, 0
    %12 = vsyncpa [#allocation8], 0
    %s13 = scalar_lea.sflag [#allocation8], 1
    %14 = vsyncpa %s13, 0
    %15 = vsyncpa [#allocation6], 0
    %16 = vsyncpa [#allocation11], 0
    loop: start=0, step=1, limit=4
    $region2: #{tpu_custom_call.1} parent=1 // loop_pre_header
      _
    $region3: #{tpu_custom_call.1} parent=1 // loop_header
      %s18 = sphi 0, %s22
      %p19 = scmp.ge.s32.totalorder %s18, 4
      %s25 = sphi 0, %s37
      %s26 = sphi 0, %s33
      %s27 = sphi 0, %s25
      %s28 = sphi 0, %s26
      %s29 = sphi 0, %s27
      %s30 = sphi 0, %s28
      %s42 = sphi 0, %s44
      %s45 = sphi 0, %s42
      %s46 = sphi 0, %s45
      %s62 = sphi 0, %s46
      %s70 = sphi 0, %s72
      %s73 = sphi 0, %s70
      %s74 = sphi 0, %s73
      %s90 = sphi 0, %s74
      %s94 = sphi 0, %s94
      %s96 = sphi 0, %s94
      %s97 = sphi 0, %s96
      %s111 = sphi 0, %s97
      %s115 = sphi 0, %s115
      %s117 = sphi 0, %s115
      %s118 = sphi 0, %s117
      %s132 = sphi 0, %s118
    $region4: #{tpu_custom_call.1} parent=1 // loop_header_branch
      %21 = sbr.rel (%p19) target = $region8
    $region5: #{tpu_custom_call.1} parent=1 // loop_body
      %s23 = ssub.s32 %s18, 1
      %s24 = ssub.s32 %s18, 2
      %s31 = sadd.s32 1, %s26
      %p32 = scmp.ge.s32.totalorder %s31, 1
      %s33 = scalar_select %p32, 0, %s31
      %s34 = sadd.s32 1, %s25
      %s35 = scalar_select %p32, %s34, %s25
      %p36 = scmp.ge.s32.totalorder %s35, 2
      %s37 = scalar_select %p36, 0, %s35
      %s38 = ssub.s32 %s25, %s37
      %s39 = ssub.s32 %s26, %s33
      %s40 = sor.u32 %s38, %s39
      %p41 = scmp.eq.s32.totalorder %s40, 0
      %s43 = sadd.s32 %s42, 1
      %s44 = scalar_select %p41, %s42, %s43
      %p47 = pneg %p41
      %p48 = scmp.eq.s32.totalorder %s18, 1
      %p49 = por %p47, %p48
      %p50 = scmp.ne.s32.totalorder %s42, %s45
      %p51 = scmp.eq.s32.totalorder %s18, 0
      %p52 = por %p50, %p51
      %p53 = scmp.ne.s32.totalorder %s42, %s45
      %p54 = scmp.eq.s32.totalorder %s23, 1
      %p55 = por %p53, %p54
      %p56 = scmp.ne.s32.totalorder %s45, %s46
      %p57 = scmp.eq.s32.totalorder %s23, 0
      %p58 = por %p56, %p57
      %p59 = scmp.ne.s32.totalorder %s45, %s46
      %p60 = scmp.eq.s32.totalorder %s24, 1
      %p61 = por %p59, %p60
      %p63 = scmp.ne.s32.totalorder %s46, %s62
      %p64 = scmp.eq.s32.totalorder %s24, 0
      %p65 = por %p63, %p64
      %s66 = ssub.s32 %s25, %s37
      %s67 = ssub.s32 %s26, %s33
      %s68 = sor.u32 %s66, %s67
      %p69 = scmp.eq.s32.totalorder %s68, 0
      %s71 = sadd.s32 %s70, 1
      %s72 = scalar_select %p69, %s70, %s71
      %p75 = pneg %p69
      %p76 = scmp.eq.s32.totalorder %s18, 1
      %p77 = por %p75, %p76
      %p78 = scmp.ne.s32.totalorder %s70, %s73
      %p79 = scmp.eq.s32.totalorder %s18, 0
      %p80 = por %p78, %p79
      %p81 = scmp.ne.s32.totalorder %s70, %s73
      %p82 = scmp.eq.s32.totalorder %s23, 1
      %p83 = por %p81, %p82
      %p84 = scmp.ne.s32.totalorder %s73, %s74
      %p85 = scmp.eq.s32.totalorder %s23, 0
      %p86 = por %p84, %p85
      %p87 = scmp.ne.s32.totalorder %s73, %s74
      %p88 = scmp.eq.s32.totalorder %s24, 1
      %p89 = por %p87, %p88
      %p91 = scmp.ne.s32.totalorder %s74, %s90
      %p92 = scmp.eq.s32.totalorder %s24, 0
      %p93 = por %p91, %p92
      %s95 = sadd.s32 %s94, 1
      %p98 = scmp.eq.s32.totalorder %s18, 1
      %p99 = scmp.ne.s32.totalorder %s94, %s96
      %p100 = scmp.eq.s32.totalorder %s18, 0
      %p101 = por %p99, %p100
      %p102 = scmp.ne.s32.totalorder %s94, %s96
      %p103 = scmp.eq.s32.totalorder %s23, 1
      %p104 = por %p102, %p103
      %p105 = scmp.ne.s32.totalorder %s96, %s97
      %p106 = scmp.eq.s32.totalorder %s23, 0
      %p107 = por %p105, %p106
      %p108 = scmp.ne.s32.totalorder %s96, %s97
      %p109 = scmp.eq.s32.totalorder %s24, 1
      %p110 = por %p108, %p109
      %p112 = scmp.ne.s32.totalorder %s97, %s111
      %p113 = scmp.eq.s32.totalorder %s24, 0
      %p114 = por %p112, %p113
      %s116 = sadd.s32 %s115, 1
      %p119 = scmp.eq.s32.totalorder %s18, 1
      %p120 = scmp.ne.s32.totalorder %s115, %s117
      %p121 = scmp.eq.s32.totalorder %s18, 0
      %p122 = por %p120, %p121
      %p123 = scmp.ne.s32.totalorder %s115, %s117
      %p124 = scmp.eq.s32.totalorder %s23, 1
      %p125 = por %p123, %p124
      %p126 = scmp.ne.s32.totalorder %s117, %s118
      %p127 = scmp.eq.s32.totalorder %s23, 0
      %p128 = por %p126, %p127
      %p129 = scmp.ne.s32.totalorder %s117, %s118
      %p130 = scmp.eq.s32.totalorder %s24, 1
      %p131 = por %p129, %p130
      %p133 = scmp.ne.s32.totalorder %s118, %s132
      %p134 = scmp.eq.s32.totalorder %s24, 0
      %p135 = por %p133, %p134
      %p136 = scmp.le.s32.totalorder 1, %s18
      %p137 = scmp.lt.s32.totalorder %s18, 3
      %p138 = pnand %p136, %p137
      %p139 = pneg %p138
      // Predicated region
      $region9: #{tpu_custom_call.1} parent=5 // pred_check
        _
      $region10: #{tpu_custom_call.1} parent=5 // pred_check_branch
        %141 = sbr.rel (%p138) target = $region12
      $region11: #{tpu_custom_call.1} parent=5 // pred_region
        %s142 = ssub.s32 %s18, 1
      $region12: #{tpu_custom_call.1} parent=5 // pred_fallthru
        _
      %p143 = scmp.lt.s32.totalorder %s18, 2
      // Predicated region
      $region13: #{tpu_custom_call.1} parent=5 // pred_check
        %p144 = pneg %p143
      $region14: #{tpu_custom_call.1} parent=5 // pred_check_branch
        %146 = sbr.rel (%p144) target = $region16
      $region15: #{tpu_custom_call.1} parent=5 // pred_region
        // Predicated region
        $region17: #{tpu_custom_call.1} parent=15 // pred_check
          %p147 = pneg %p52
        $region18: #{tpu_custom_call.1} parent=15 // pred_check_branch
          %149 = sbr.rel (%p147) target = $region20
        $region19: #{tpu_custom_call.1} parent=15 // pred_region
          %s150 = sand.u32 %s42, 1
          %s151 = scalar_lea.sflag [#allocation5], %s150
          %s152 = sand.u32 %s42, 1
          %s153 = smul.addr %s152, 8
          %s154 = scalar_lea.vmem [#allocation4], %s153
          %s155 = smul.u32 2, %s26
          %s157 = ssub.s32 128, 128
          %158 = vsyncadd %s151, %s157
          %s159 = smul.addr %s25, 2
          %s160 = sadd.s32 %s155, %s159
          %s161 = smul.addr %s160, 64
          %s162 = scalar_lea.hbm %s0, %s161
          %s164 = sshll.u32 %s154, 4
          %s165 = int_to_ptr.vmem [resolvable:$true] %s164
          %167 = dma.hbm_to_vmem [thread:$0]  %s162, 128, %s165, %s151
        $region20: #{tpu_custom_call.1} parent=15 // pred_fallthru
          _
        // Predicated region
        $region21: #{tpu_custom_call.1} parent=15 // pred_check
          %p168 = pneg %p80
        $region22: #{tpu_custom_call.1} parent=15 // pred_check_branch
          %170 = sbr.rel (%p168) target = $region24
        $region23: #{tpu_custom_call.1} parent=15 // pred_region
          %s171 = sand.u32 %s70, 1
          %s172 = scalar_lea.sflag [#allocation8], %s171
          %s173 = sand.u32 %s70, 1
          %s174 = smul.addr %s173, 2
          %s175 = scalar_lea.vmem [#allocation7], %s174
          %s176 = smul.u32 2, %s26
          %s178 = ssub.s32 32, 32
          %179 = vsyncadd %s172, %s178
          %s180 = smul.addr %s25, 2
          %s181 = sadd.s32 %s176, %s180
          %s182 = smul.addr %s181, 16
          %s183 = scalar_lea.hbm %s1, %s182
          %s185 = sshll.u32 %s175, 4
          %s186 = int_to_ptr.vmem [resolvable:$true] %s185
          %188 = dma.hbm_to_vmem [thread:$0]  %s183, 32, %s186, %s172
        $region24: #{tpu_custom_call.1} parent=15 // pred_fallthru
          _
      $region16: #{tpu_custom_call.1} parent=5 // pred_fallthru
        _
      %p189 = scmp.le.s32.totalorder 1, %s18
      %p190 = scmp.lt.s32.totalorder %s18, 3
      %p191 = pnand %p189, %p190
      %p192 = pneg %p191
      // Predicated region
      $region25: #{tpu_custom_call.1} parent=5 // pred_check
        _
      $region26: #{tpu_custom_call.1} parent=5 // pred_check_branch
        %194 = sbr.rel (%p191) target = $region28
      $region27: #{tpu_custom_call.1} parent=5 // pred_region
        %s195 = ssub.s32 %s18, 1
        %s196 = sand.u32 %s45, 1
        %s197 = scalar_lea.sflag [#allocation5], %s196
        %s198 = sand.u32 %s45, 1
        %s199 = smul.addr %s198, 8
        %s200 = scalar_lea.vmem [#allocation4], %s199
        // Predicated region
        $region29: #{tpu_custom_call.1} parent=27 // pred_check
          %p201 = pneg %p58
        $region30: #{tpu_custom_call.1} parent=27 // pred_check_branch
          %203 = sbr.rel (%p201) target = $region32
        $region31: #{tpu_custom_call.1} parent=27 // pred_region
          %204 = dma.done %s197, 128
        $region32: #{tpu_custom_call.1} parent=27 // pred_fallthru
          _
        %s205 = sand.u32 %s73, 1
        %s206 = scalar_lea.sflag [#allocation8], %s205
        %s207 = sand.u32 %s73, 1
        %s208 = smul.addr %s207, 2
        %s209 = scalar_lea.vmem [#allocation7], %s208
        // Predicated region
        $region33: #{tpu_custom_call.1} parent=27 // pred_check
          %p210 = pneg %p86
        $region34: #{tpu_custom_call.1} parent=27 // pred_check_branch
          %212 = sbr.rel (%p210) target = $region36
        $region35: #{tpu_custom_call.1} parent=27 // pred_region
          %213 = dma.done %s206, 32
        $region36: #{tpu_custom_call.1} parent=27 // pred_fallthru
          _
        %s214 = sand.u32 %s45, 1
        %s215 = scalar_lea.sflag [#allocation5], %s214
        %s216 = sand.u32 %s45, 1
        %s217 = smul.addr %s216, 8
        %s218 = scalar_lea.vmem [#allocation4], %s217
        %p219 = pneg %p58
        %p220 = pneg %p55
        %s221 = sand.u32 %s73, 1
        %s222 = scalar_lea.sflag [#allocation8], %s221
        %s223 = sand.u32 %s73, 1
        %s224 = smul.addr %s223, 2
        %s225 = scalar_lea.vmem [#allocation7], %s224
        %p226 = pneg %p86
        %p227 = pneg %p83
        %p228 = pneg %p107
        %p229 = pneg %p104
        %p230 = pneg %p128
        %p231 = pneg %p125
        %s232 = smul.u32 2, %s28
        %s233 = smul.u32 2, %s28
        %p234 = scmp.eq.s32.totalorder %s27, 0
        %p235 = scmp.eq.s32.totalorder %s28, 0
        %p236 = pnand %p234, %p235
        %p237 = pneg %p236
        // Predicated region
        $region37: #{tpu_custom_call.1} parent=27 // pred_check
          _
        $region38: #{tpu_custom_call.1} parent=27 // pred_check_branch
          %239 = sbr.rel (%p236) target = $region40
        $region39: #{tpu_custom_call.1} parent=27 // pred_region
          %v240 = vlaneseq
          %vm241 = vcmp.ge.s32.totalorder %v240, 0
          %vm242 = vcmp.lt.s32.totalorder %v240, 256
          %vm243 = vmand %vm241, %vm242
          %244 = vst.msk [vmem:[#allocation2] sm:$0x3] %vm243, 0.0
          %245 = vst.msk [vmem:[#allocation3] sm:$0x3] %vm243, 0.0
        $region40: #{tpu_custom_call.1} parent=27 // pred_fallthru
          _
        %v246 = vld [vmem:[%s200] sm:$0xff]
        %v247 = vld [vmem:[%s209] sm:$0x3]
        %v249 = vcombine.high %v246, %v246
        %vm251 = vcmask 1043456
        %v252 = vsel %vm251, %v246, -inf
        %v253 = vrot.slane %v252, 4
        %v254 = vmax.f32 %v252, %v253
        %v255 = vrot.slane %v254, 2
        %v256 = vmax.f32 %v254, %v255
        %v257 = vrot.slane %v256, 1
        %v258 = vmax.f32 %v256, %v257
        %v259 = vsel %vm251, %v249, -inf
        %v260 = vrot.slane %v259, 4
        %v261 = vmax.f32 %v259, %v260
        %v262 = vrot.slane %v261, 2
        %v263 = vmax.f32 %v261, %v262
        %v264 = vrot.slane %v263, 1
        %v265 = vmax.f32 %v263, %v264
        %v268 = vcombine.low %v258, %v265
        %v270 = vsub.f32 %v246, %v268
        %v271 = vmul.f32 %v270, 1.442695
        %v272 = vpow.pop %v271
        %v274 = vcombine.high %v272, %v272
        %v276 = vsel %vm251, %v272, 0.0
        %v277 = vrot.slane %v276, 4
        %v278 = vadd.f32 %v276, %v277
        %v279 = vrot.slane %v278, 2
        %v280 = vadd.f32 %v278, %v279
        %v281 = vrot.slane %v280, 1
        %v282 = vadd.f32 %v280, %v281
        %v283 = vsel %vm251, %v274, 0.0
        %v284 = vrot.slane %v283, 4
        %v285 = vadd.f32 %v283, %v284
        %v286 = vrot.slane %v285, 2
        %v287 = vadd.f32 %v285, %v286
        %v288 = vrot.slane %v287, 1
        %v289 = vadd.f32 %v287, %v288
        %v290 = vlog2.pop %v282
        %v291 = vmul.f32 %v290, 0.6931472
        %v292 = vlog2.pop %v289
        %v293 = vmul.f32 %v292, 0.6931472
        %v294 = vadd.f32 %v291, %v258
        %v295 = vadd.f32 %v293, %v265
        %v296 = vlaneseq
        %v297 = vshrl.u32 %v296, 7
        %v298 = vlaneseq
        %v299 = vshrl.u32 %v298, 7
        %v300 = vsub.s32 0, %v299
        %v301 = vrot.slane %v247, %v300
        %v302 = vlaneseq
        %v303 = vshrl.u32 %v302, 7
        %v304 = vsub.s32 1, %v303
        %v305 = vrot.slane %v247, %v304
        %vm306 = vcmp.eq.s32.totalorder %v297, %v301
        %vm307 = vcmp.eq.s32.totalorder %v297, %v305
        %v308 = vsel %vm306, %v246, 0.0
        %v309 = vsel %vm307, %v249, 0.0
        %v310 = vsel %vm251, %v308, 0.0
        %v311 = vrot.slane %v310, 4
        %v312 = vadd.f32 %v310, %v311
        %v313 = vrot.slane %v312, 2
        %v314 = vadd.f32 %v312, %v313
        %v315 = vrot.slane %v314, 1
        %v316 = vadd.f32 %v314, %v315
        %v317 = vsel %vm251, %v309, 0.0
        %v318 = vrot.slane %v317, 4
        %v319 = vadd.f32 %v317, %v318
        %v320 = vrot.slane %v319, 2
        %v321 = vadd.f32 %v319, %v320
        %v322 = vrot.slane %v321, 1
        %v323 = vadd.f32 %v321, %v322
        %vm324 = vcmp.ne.s32.totalorder %v247, 255
        %v325 = vld [vmem:[#allocation2] sm:$0x3]
        %v326 = vsub.f32 %v294, %v316
        %v327 = vsub.f32 %v295, %v323
        %v330 = vcombine.low %v326, %v327
        %v332 = vunpack.c.l.s4 1966171168
        %v333 = vunpack.c.0.s8 %v332
        %v334 = vlaneseq
        %v335 = vshrl.u32 %v334, 7
        %v336 = vsub.s32 %v333, %v335
        %v337 = vrot.slane %v330, %v336
        %v339 = vunpack.c.l.s4 1966171168
        %v340 = vunpack.c.0.s8 %v339
        %v341 = vlaneseq
        %v342 = vshrl.u32 %v341, 7
        %v343 = vsub.s32 %v340, %v342
        %v344 = vrot.slane %v337, %v343
        %v346 = vsel %vm324, %v344, 0.0
        %v347 = vadd.f32 %v325, %v346
        %v348 = vlaneseq
        %vm349 = vcmp.ge.s32.totalorder %v348, 0
        %vm350 = vcmp.lt.s32.totalorder %v348, 256
        %vm351 = vmand %vm349, %vm350
        %352 = vst.msk [vmem:[#allocation2] sm:$0x3] %vm351, %v347
        %v353 = vld [vmem:[#allocation3] sm:$0x3]
        %v354 = vsel %vm324, 1, 0
        %v355 = vcvt.s32.f32 %v354
        %v356 = vadd.f32 %v353, %v355
        %357 = vst.msk [vmem:[#allocation3] sm:$0x3] %vm351, %v356
        %p358 = scmp.eq.s32.totalorder %s27, 1
        %p359 = pnand %p358, %p235
        %p360 = pneg %p359
        // Predicated region
        $region41: #{tpu_custom_call.1} parent=27 // pred_check
          _
        $region42: #{tpu_custom_call.1} parent=27 // pred_check_branch
          %362 = sbr.rel (%p359) target = $region44
        $region43: #{tpu_custom_call.1} parent=27 // pred_region
          %v363 = vld [vmem:[#allocation2] sm:$0x3]
          %v365 = vlaneseq
          %v366 = vshrl.u32 %v365, 7
          %v367 = vsub.s32 0, %v366
          %v368 = vrot.slane %v363, %v367
          %v369 = vlaneseq
          %v370 = vshrl.u32 %v369, 7
          %v371 = vsub.s32 1, %v370
          %v372 = vrot.slane %v363, %v371
          %vm375 = vcmask 1040384
          %v376 = vsel %vm375, %v368, 0.0
          %v377 = vsel %vm375, %v372, 0.0
          %v378 = vadd.f32 %v376, %v377
          %379 = vadd.xlane.f32.xlu0 %v378
          %v380 = vpop.xlane.xlu0 %379
          %v381 = vrot.slane %v380, 4
          %v382 = vadd.f32 %v380, %v381
          %v383 = vrot.slane %v382, 2
          %v384 = vadd.f32 %v382, %v383
          %v385 = vrot.slane %v384, 1
          %v386 = vadd.f32 %v384, %v385
          %s387 = vtos %v386
          %s388 = scalar_lea.smem [#allocation9], 0
          %389 = sst [smem:[%s388]] %s387
          %v390 = vld [vmem:[#allocation3] sm:$0x3]
          %v392 = vlaneseq
          %v393 = vshrl.u32 %v392, 7
          %v394 = vsub.s32 0, %v393
          %v395 = vrot.slane %v390, %v394
          %v396 = vlaneseq
          %v397 = vshrl.u32 %v396, 7
          %v398 = vsub.s32 1, %v397
          %v399 = vrot.slane %v390, %v398
          %v402 = vsel %vm375, %v395, 0.0
          %v403 = vsel %vm375, %v399, 0.0
          %v404 = vadd.f32 %v402, %v403
          %405 = vadd.xlane.f32.xlu0 %v404
          %v406 = vpop.xlane.xlu0 %405
          %v407 = vrot.slane %v406, 4
          %v408 = vadd.f32 %v406, %v407
          %v409 = vrot.slane %v408, 2
          %v410 = vadd.f32 %v408, %v409
          %v411 = vrot.slane %v410, 1
          %v412 = vadd.f32 %v410, %v411
          %s413 = vtos %v412
          %s414 = scalar_lea.smem [#allocation10], 0
          %415 = sst [smem:[%s414]] %s413
        $region44: #{tpu_custom_call.1} parent=27 // pred_fallthru
          _
        // Predicated region
        $region45: #{tpu_custom_call.1} parent=27 // pred_check
          %p416 = pneg %p104
        $region46: #{tpu_custom_call.1} parent=27 // pred_check_branch
          %418 = sbr.rel (%p416) target = $region48
        $region47: #{tpu_custom_call.1} parent=27 // pred_region
          %s420 = ssub.s32 16, 16
          %421 = vsyncadd [#allocation6], %s420
          %424 = dma.smem_to_hbm [#allocation9], 16, %s2, [#allocation6]
        $region48: #{tpu_custom_call.1} parent=27 // pred_fallthru
          _
        // Predicated region
        $region49: #{tpu_custom_call.1} parent=27 // pred_check
          %p425 = pneg %p125
        $region50: #{tpu_custom_call.1} parent=27 // pred_check_branch
          %427 = sbr.rel (%p425) target = $region52
        $region51: #{tpu_custom_call.1} parent=27 // pred_region
          %s429 = ssub.s32 16, 16
          %430 = vsyncadd [#allocation11], %s429
          %433 = dma.smem_to_hbm [#allocation10], 16, %s3, [#allocation11]
        $region52: #{tpu_custom_call.1} parent=27 // pred_fallthru
          _
        // Predicated region
        $region53: #{tpu_custom_call.1} parent=27 // pred_check
          %p434 = pneg %p104
        $region54: #{tpu_custom_call.1} parent=27 // pred_check_branch
          %436 = sbr.rel (%p434) target = $region56
        $region55: #{tpu_custom_call.1} parent=27 // pred_region
          %437 = dma.done [#allocation6], 16
        $region56: #{tpu_custom_call.1} parent=27 // pred_fallthru
          _
        // Predicated region
        $region57: #{tpu_custom_call.1} parent=27 // pred_check
          %p438 = pneg %p125
        $region58: #{tpu_custom_call.1} parent=27 // pred_check_branch
          %440 = sbr.rel (%p438) target = $region60
        $region59: #{tpu_custom_call.1} parent=27 // pred_region
          %441 = dma.done [#allocation11], 16
        $region60: #{tpu_custom_call.1} parent=27 // pred_fallthru
          _
        %442 = sfence
      $region28: #{tpu_custom_call.1} parent=5 // pred_fallthru
        _
      %p443 = scmp.le.s32.totalorder 2, %s18
      // Predicated region
      $region61: #{tpu_custom_call.1} parent=5 // pred_check
        %p444 = pneg %p443
      $region62: #{tpu_custom_call.1} parent=5 // pred_check_branch
        %446 = sbr.rel (%p444) target = $region64
      $region63: #{tpu_custom_call.1} parent=5 // pred_region
        %s447 = ssub.s32 %s18, 2
      $region64: #{tpu_custom_call.1} parent=5 // pred_fallthru
        _
    $region6: #{tpu_custom_call.1} parent=1 // loop_footer
      %s22 = sadd.s32 1, %s18
    $region7: #{tpu_custom_call.1} parent=1 // loop_footer_branch
      %17 = sbr.rel target = $region3
    $region8: #{tpu_custom_call.1} parent=1 // loop_exit
      _
    %448 = vsyncpa [#allocation5], 1
    %s449 = scalar_lea.sflag [#allocation5], 1
    %450 = vsyncpa %s449, 1
    %451 = vsyncpa [#allocation8], 1
    %s452 = scalar_lea.sflag [#allocation8], 1
    %453 = vsyncpa %s452, 1
    %454 = vsyncpa [#allocation6], 1
    %s455 = scalar_lea.sflag [#allocation6], 1
    %456 = vsyncpa %s455, 1
    %457 = vsyncpa [#allocation11], 1

</llo_original>
